<compile_context>
chip_gen: v5e
topology: v5e:2x2
jax: 0.10.0
libtpu: 0.0.40
codegen_flags: <defaults>
</compile_context>

<pallas_src>
import jax
import jax.numpy as jnp
from jax.experimental import pallas as pl
from jax.experimental.pallas import tpu as pltpu


def _round_up(x, m):
    return ((x + m - 1) // m) * m


def _stream_vmem_budget_bytes():
    """VMEM budget for the vocab-streaming tile buffers (generation-aware)."""
    try:
        cap = pltpu.get_tpu_info().vmem_capacity_bytes
    except Exception:
        cap = 64 * 1024 * 1024          # conservative fallback (v7x per-TC VMEM)
    # Leave headroom for compiler-internal scratch and small residents.
    return max(24 * 1024 * 1024, min(int(cap * 0.6), 80 * 1024 * 1024))


def _pick_vocab_tile(hidden_dim, v_pad128, wo_itemsize, budget_bytes):
    """Largest multiple-of-128 vocab tile whose double-buffered wo/out/bo
    stream fits inside the VMEM budget (assumes batch padded to <= 64)."""
    per_col = 2 * hidden_dim * wo_itemsize + 2 * 64 * 4 + 2 * 4
    tn = (budget_bytes // per_col) // 128 * 128
    return int(max(128, min(tn, 8192, v_pad128)))


# ----------------------------------------------------------------------------
# Stage 1: one-shot prologue -> hidden state (B, H)
# ----------------------------------------------------------------------------
def _hidden_state_kernel(enc_ref, wi_ref, bi_ref, wa1_ref, wa2_ref, ba_ref,
                         wh_ref, bh_ref, hid_ref):
    enc = enc_ref[...]                                            # (B, T, E)

    # _get_init_state: mean over time (f32 accumulation), Linear(E->E), ReLU.
    mean = jnp.mean(enc, axis=1, dtype=jnp.float32)               # (B, E)
    init = jnp.maximum(
        jnp.dot(mean, wi_ref[...], preferred_element_type=jnp.float32)
        + bi_ref[...], 0.0)                                       # (B, E) f32

    # _attention with split weights and a lane-dense (B, T) score layout:
    #   score[b, t] = init[b] . wa1 + enc[b, t] . wa2 + ba
    s_init = jnp.sum(init * wa1_ref[...], axis=1, keepdims=True)  # (B, 1)
    s_enc = jnp.sum(enc * wa2_ref[...][None, :, :], axis=2,
                    dtype=jnp.float32)                            # (B, T)
    scores = jnp.maximum(s_enc + s_init + ba_ref[0], 0.0)         # ReLU
    scores = scores - jnp.max(scores, axis=1, keepdims=True)      # stable softmax
    ex = jnp.exp(scores)
    attn = ex / jnp.sum(ex, axis=1, keepdims=True)                # (B, T)

    # Attended state: batched (1 x T) @ (T x E) on the MXU (no relayout).
    attned = jnp.einsum('bqt,bte->bqe',
                        attn.astype(enc.dtype)[:, None, :], enc,
                        preferred_element_type=jnp.float32)[:, 0, :]   # (B, E)

    # Hidden layer: single fused K=2E matmul on [init, attned], ReLU.
    pred_in = jnp.concatenate([init, attned], axis=1)             # (B, 2E)
    hid = jnp.maximum(
        jnp.dot(pred_in, wh_ref[...], preferred_element_type=jnp.float32)
        + bh_ref[...], 0.0)                                       # (B, H) f32
    hid_ref[...] = hid.astype(hid_ref.dtype)                      # cast once


# ----------------------------------------------------------------------------
# Stage 2: stream the (H, V) output weight in lane-dense vocab tiles
# ----------------------------------------------------------------------------
def _output_tile_kernel(hid_ref, wo_ref, bo_ref, out_ref):
    # Per grid step: pure DMA-wait + vmatmul + bias add (no casts, no branch).
    out_ref[...] = (
        jnp.dot(hid_ref[...], wo_ref[...], preferred_element_type=jnp.float32)
        + bo_ref[...]).astype(out_ref.dtype)                      # (B, TN)


# ----------------------------------------------------------------------------
# Wrapper
# ----------------------------------------------------------------------------
def prepare_word_predictor_params(wi, bi, wa1, wa2, ba, wh1, wh2, bh, wo, bo,
                                  *, stream_dtype=jnp.bfloat16,
                                  vocab_tile=None):
    """One-time parameter prep (call ONCE, not per forward).

    Weights are stored as (in, out) so `x @ W + b == nn.Linear(x)`:
      wi  (E, E), bi (1, E)          init_layer
      wa1 (1, E), wa2 (1, E), ba     attn_layer.weight split [init | enc], bias
      wh1 (E, H), wh2 (E, H), bh     hidden_layer.weight split, bias
      wo  (H, V), bo (1, V)          output_layer
    """
    H, V = wo.shape
    v_pad128 = _round_up(V, 128)
    if vocab_tile is None:
        tn = _pick_vocab_tile(H, v_pad128, jnp.dtype(stream_dtype).itemsize,
                              _stream_vmem_budget_bytes())
    else:
        tn = min(_round_up(vocab_tile, 128), v_pad128)
    v_pad = _round_up(V, tn)

    wo_p = jnp.pad(wo, ((0, 0), (0, v_pad - V))).astype(stream_dtype)
    bo_p = jnp.pad(jnp.reshape(bo, (1, V)),
                   ((0, 0), (0, v_pad - V))).astype(jnp.float32)

    return dict(
        wi=jnp.asarray(wi, jnp.float32),
        bi=jnp.reshape(bi, (1, -1)).astype(jnp.float32),
        wa1=jnp.reshape(wa1, (1, -1)).astype(jnp.float32),
        wa2=jnp.reshape(wa2, (1, -1)).astype(jnp.float32),
        ba=jnp.reshape(ba, (1,)).astype(jnp.float32),          # SMEM scalar
        wh=jnp.concatenate([wh1, wh2], axis=0).astype(jnp.float32),  # (2E, H)
        bh=jnp.reshape(bh, (1, -1)).astype(jnp.float32),
        wo=wo_p, bo=bo_p,
        vocab=V, vocab_tile=int(tn), stream_dtype=stream_dtype,
    )


def word_predictor(enc_tbe, params):
    """Forward pass. enc_tbe is (T, B, E) exactly as in the PyTorch module."""
    T, B, E = enc_tbe.shape
    wo, bo = params["wo"], params["bo"]
    H, v_pad = wo.shape
    tn = params["vocab_tile"]
    V = params["vocab"]
    stream_dtype = params["stream_dtype"]

    # (B, T, E) layout so attention scores are lane-dense (B, T) in-kernel.
    # Pad batch to full packed sublane groups (16 rows for bf16 hid, 8 for f32).
    b_pad = _round_up(B, 16 if jnp.dtype(stream_dtype).itemsize < 4 else 8)
    enc = jnp.transpose(enc_tbe, (1, 0, 2))
    if b_pad != B:
        enc = jnp.pad(enc, ((0, b_pad - B), (0, 0), (0, 0)))

    # ---- stage 1: one-shot prologue -> hid (b_pad, H) in the stream dtype ---
    hid = pl.pallas_call(
        _hidden_state_kernel,
        out_shape=jax.ShapeDtypeStruct((b_pad, H), stream_dtype),
        grid=(1,),
        in_specs=[
            pl.BlockSpec((b_pad, T, E), lambda i: (0, 0, 0)),     # enc
            pl.BlockSpec((E, E), lambda i: (0, 0)),               # wi
            pl.BlockSpec((1, E), lambda i: (0, 0)),               # bi
            pl.BlockSpec((1, E), lambda i: (0, 0)),               # wa1
            pl.BlockSpec((1, E), lambda i: (0, 0)),               # wa2
            pl.BlockSpec(memory_space=pltpu.MemorySpace.SMEM),    # ba scalar
            pl.BlockSpec((2 * E, H), lambda i: (0, 0)),           # wh (fused)
            pl.BlockSpec((1, H), lambda i: (0, 0)),               # bh
        ],
        out_specs=pl.BlockSpec((b_pad, H), lambda i: (0, 0)),
        compiler_params=pltpu.CompilerParams(
            dimension_semantics=("arbitrary",)),
    )(enc, params["wi"], params["bi"], params["wa1"], params["wa2"],
      params["ba"], params["wh"], params["bh"])

    # ---- stage 2: stream the (H, V) weight, tiles independent -> parallel ---
    budget = _stream_vmem_budget_bytes()
    cost = pl.CostEstimate(
        flops=int(2 * b_pad * H * v_pad),
        transcendentals=0,
        bytes_accessed=int(wo.size * wo.dtype.itemsize
                           + bo.size * bo.dtype.itemsize
                           + hid.size * hid.dtype.itemsize
                           + b_pad * v_pad * 4),
    )
    out = pl.pallas_call(
        _output_tile_kernel,
        out_shape=jax.ShapeDtypeStruct((b_pad, v_pad), jnp.float32),
        grid=(v_pad // tn,),
        in_specs=[
            pl.BlockSpec((b_pad, H), lambda j: (0, 0)),           # hid (tiny)
            pl.BlockSpec((H, tn), lambda j: (0, j)),              # wo vocab tile
            pl.BlockSpec((1, tn), lambda j: (0, j)),              # bo vocab tile
        ],
        out_specs=pl.BlockSpec((b_pad, tn), lambda j: (0, j)),
        compiler_params=pltpu.CompilerParams(
            # No cross-tile state (prologue split out): vocab tiles are fully
            # independent -> megacore-parallel on v7x, no-op on v5e/v6e.
            dimension_semantics=("parallel",),
            vmem_limit_bytes=budget + 8 * 1024 * 1024,
        ),
        cost_estimate=cost,
    )(hid, wo, bo)

    return out[:B, :V]


def word_predictor_ref(enc, wi, bi, wa1, wa2, ba, wh1, wh2, bh, wo, bo):
    """Pure-JAX reference mirroring the PyTorch forward (enc is (T, B, E))."""
    init = jax.nn.relu(jnp.mean(enc, axis=0) @ wi + bi)            # (B, E)
    s = jax.nn.relu(
        jnp.sum(init * wa1, axis=1, keepdims=True)[None]
        + jnp.sum(enc * wa2[None], axis=2, keepdims=True) + ba)    # (T, B, 1)
    attn = jax.nn.softmax(s, axis=0)
    attned = jnp.sum(enc * attn, axis=0)                           # (B, E)
    hid = jax.nn.relu(init @ wh1 + attned @ wh2 + bh)
    return hid @ wo + bo
# TODO(synk): get_normalized_probs (log_softmax/softmax over logits) is not part
# of forward(); left to plain XLA on the returned logits.


if __name__ == "__main__":
    # Small shapes consistent with the module: src_len=8, batch=4,
    # encoder_output_dim=32, hidden_dim=32, output_dim=64.
    T, B, E, H, V = 8, 4, 32, 32, 64
    key = jax.random.PRNGKey(0)
    ks = jax.random.split(key, 12)
    scale = 0.1

    enc = jax.random.normal(ks[0], (T, B, E), jnp.float32)

    # Deterministic synthetic parameters (stored as (in, out) / row vectors).
    wi  = jax.random.normal(ks[1], (E, E), jnp.float32) * scale   # init_layer.weight.T
    bi  = jax.random.normal(ks[2], (1, E), jnp.float32) * scale   # init_layer.bias
    wa1 = jax.random.normal(ks[3], (1, E), jnp.float32) * scale   # attn_layer.weight[:, :E]
    wa2 = jax.random.normal(ks[4], (1, E), jnp.float32) * scale   # attn_layer.weight[:, E:]
    ba  = jax.random.normal(ks[5], (1, 1), jnp.float32) * scale   # attn_layer.bias
    wh1 = jax.random.normal(ks[6], (E, H), jnp.float32) * scale   # hidden_layer.weight[:, :E].T
    wh2 = jax.random.normal(ks[7], (E, H), jnp.float32) * scale   # hidden_layer.weight[:, E:].T
    bh  = jax.random.normal(ks[8], (1, H), jnp.float32) * scale   # hidden_layer.bias
    wo  = jax.random.normal(ks[9], (H, V), jnp.float32) * scale   # output_layer.weight.T
    bo  = jax.random.normal(ks[10], (1, V), jnp.float32) * scale  # output_layer.bias

    ref = word_predictor_ref(enc, wi, bi, wa1, wa2, ba, wh1, wh2, bh, wo, bo)

    # f32 streaming path: tight check against the pure-JAX reference.
    params_f32 = prepare_word_predictor_params(
        wi, bi, wa1, wa2, ba, wh1, wh2, bh, wo, bo, stream_dtype=jnp.float32)
    out_f32 = jax.block_until_ready(word_predictor(enc, params_f32))
    assert out_f32.shape == (B, V)
    assert jnp.allclose(out_f32, ref, atol=1e-5, rtol=1e-5), "f32 mismatch"

    # bf16 streaming path (default; ~2x fewer HBM bytes on the big weight).
    params_bf16 = prepare_word_predictor_params(
        wi, bi, wa1, wa2, ba, wh1, wh2, bh, wo, bo)
    out_bf16 = jax.block_until_ready(word_predictor(enc, params_bf16))
    assert out_bf16.shape == (B, V)
    assert jnp.allclose(out_bf16, ref, atol=2e-2, rtol=2e-2), "bf16 mismatch"

    print("KERNEL_OK")
</pallas_src>

<mosaic_0001>
module attributes {stable_mosaic.version = 11 : i64} {
  func.func @_hidden_state_kernel(%arg0: i32, %arg1: memref<8x8x32xf32, #tpu.memory_space<vmem>>, %arg2: memref<32x32xf32, #tpu.memory_space<vmem>>, %arg3: memref<1x32xf32, #tpu.memory_space<vmem>>, %arg4: memref<1x32xf32, #tpu.memory_space<vmem>>, %arg5: memref<1x32xf32, #tpu.memory_space<vmem>>, %arg6: memref<1xf32, #tpu.memory_space<smem>>, %arg7: memref<64x32xf32, #tpu.memory_space<vmem>>, %arg8: memref<1x32xf32, #tpu.memory_space<vmem>>, %arg9: memref<8x32xf32, #tpu.memory_space<vmem>>) attributes {dimension_semantics = [#tpu.dimension_semantics<arbitrary>], iteration_bounds = array<i64: 1>, scalar_prefetch = 0 : i64, scratch_operands = 0 : i64, tpu.core_type = #tpu.core_type<tc>, window_params = [{pipeline_mode = #tpu.pipeline_mode<synchronous>, transform_indices = @transform_0, window_bounds = array<i64: 8, 8, 32>}, {pipeline_mode = #tpu.pipeline_mode<synchronous>, transform_indices = @transform_1, window_bounds = array<i64: 32, 32>}, {pipeline_mode = #tpu.pipeline_mode<synchronous>, transform_indices = @transform_2, window_bounds = array<i64: 1, 32>}, {pipeline_mode = #tpu.pipeline_mode<synchronous>, transform_indices = @transform_3, window_bounds = array<i64: 1, 32>}, {pipeline_mode = #tpu.pipeline_mode<synchronous>, transform_indices = @transform_4, window_bounds = array<i64: 1, 32>}, {transform_indices = @transform_5, window_bounds = array<i64: 1>}, {pipeline_mode = #tpu.pipeline_mode<synchronous>, transform_indices = @transform_6, window_bounds = array<i64: 64, 32>}, {pipeline_mode = #tpu.pipeline_mode<synchronous>, transform_indices = @transform_7, window_bounds = array<i64: 1, 32>}, {pipeline_mode = #tpu.pipeline_mode<synchronous>, transform_indices = @transform_8, window_bounds = array<i64: 8, 32>}]} {
    %c0 = arith.constant 0 : index
    %c0_0 = arith.constant 0 : index
    %c0_1 = arith.constant 0 : index
    %0 = vector.load %arg1[%c0, %c0_0, %c0_1] : memref<8x8x32xf32, #tpu.memory_space<vmem>>, vector<8x8x32xf32>
    %cst = arith.constant dense<0.000000e+00> : vector<8x32xf32>
    %1 = vector.multi_reduction <add>, %0, %cst [1] : vector<8x8x32xf32> to vector<8x32xf32>
    %cst_2 = arith.constant 8.000000e+00 : f32
    %2 = vector.broadcast %cst_2 : f32 to vector<8x32xf32>
    %3 = arith.divf %1, %2 : vector<8x32xf32>
    %c0_3 = arith.constant 0 : index
    %c0_4 = arith.constant 0 : index
    %4 = vector.load %arg2[%c0_3, %c0_4] : memref<32x32xf32, #tpu.memory_space<vmem>>, vector<32x32xf32>
    %cst_5 = arith.constant dense<0.000000e+00> : vector<8x32xf32>
    %5 = tpu.matmul %3, %4, %cst_5 {dimension_numbers = #tpu.dot_dimension_numbers<[1], [0], [0], [1], [0, 0, 1, 1], [], []>} : vector<8x32xf32>, vector<32x32xf32>, vector<8x32xf32> -> vector<8x32xf32>
    %c0_6 = arith.constant 0 : index
    %c0_7 = arith.constant 0 : index
    %6 = vector.load %arg3[%c0_6, %c0_7] : memref<1x32xf32, #tpu.memory_space<vmem>>, vector<1x32xf32>
    %7 = vector.broadcast %6 : vector<1x32xf32> to vector<8x32xf32>
    %8 = arith.addf %5, %7 : vector<8x32xf32>
    %cst_8 = arith.constant 0.000000e+00 : f32
    %9 = vector.broadcast %cst_8 : f32 to vector<8x32xf32>
    %10 = arith.maximumf %8, %9 : vector<8x32xf32>
    %c0_9 = arith.constant 0 : index
    %c0_10 = arith.constant 0 : index
    %11 = vector.load %arg4[%c0_9, %c0_10] : memref<1x32xf32, #tpu.memory_space<vmem>>, vector<1x32xf32>
    %12 = vector.broadcast %11 : vector<1x32xf32> to vector<8x32xf32>
    %13 = arith.mulf %10, %12 : vector<8x32xf32>
    %cst_11 = arith.constant dense<0.000000e+00> : vector<8xf32>
    %14 = vector.multi_reduction <add>, %13, %cst_11 [1] : vector<8x32xf32> to vector<8xf32>
    %15 = vector.shape_cast %14 : vector<8xf32> to vector<8x1xf32>
    %c0_12 = arith.constant 0 : index
    %c0_13 = arith.constant 0 : index
    %16 = vector.load %arg5[%c0_12, %c0_13] : memref<1x32xf32, #tpu.memory_space<vmem>>, vector<1x32xf32>
    %17 = vector.shape_cast %16 : vector<1x32xf32> to vector<1x1x32xf32>
    %18 = vector.broadcast %17 : vector<1x1x32xf32> to vector<8x8x32xf32>
    %19 = arith.mulf %0, %18 : vector<8x8x32xf32>
    %cst_14 = arith.constant dense<0.000000e+00> : vector<8x8xf32>
    %20 = vector.multi_reduction <add>, %19, %cst_14 [2] : vector<8x8x32xf32> to vector<8x8xf32>
    %21 = vector.broadcast %15 : vector<8x1xf32> to vector<8x8xf32>
    %22 = arith.addf %20, %21 : vector<8x8xf32>
    %c0_15 = arith.constant 0 : index
    %23 = memref.load %arg6[%c0_15] : memref<1xf32, #tpu.memory_space<smem>>
    %24 = vector.broadcast %23 : f32 to vector<8x8xf32>
    %25 = arith.addf %22, %24 : vector<8x8xf32>
    %cst_16 = arith.constant 0.000000e+00 : f32
    %26 = vector.broadcast %cst_16 : f32 to vector<8x8xf32>
    %27 = arith.maximumf %25, %26 : vector<8x8xf32>
    %cst_17 = arith.constant dense<0xFF800000> : vector<8xf32>
    %28 = vector.multi_reduction <maximumf>, %27, %cst_17 [1] : vector<8x8xf32> to vector<8xf32>
    %29 = vector.shape_cast %28 : vector<8xf32> to vector<8x1xf32>
    %30 = vector.broadcast %29 : vector<8x1xf32> to vector<8x8xf32>
    %31 = arith.subf %27, %30 : vector<8x8xf32>
    %32 = math.exp %31 : vector<8x8xf32>
    %cst_18 = arith.constant dense<0.000000e+00> : vector<8xf32>
    %33 = vector.multi_reduction <add>, %32, %cst_18 [1] : vector<8x8xf32> to vector<8xf32>
    %34 = vector.shape_cast %33 : vector<8xf32> to vector<8x1xf32>
    %35 = vector.broadcast %34 : vector<8x1xf32> to vector<8x8xf32>
    %36 = arith.divf %32, %35 : vector<8x8xf32>
    %37 = vector.shape_cast %36 : vector<8x8xf32> to vector<8x1x8xf32>
    "tpu.trace_start"() <{level = 10 : i32, message = "bqt,bte->bqe"}> : () -> ()
    %cst_19 = arith.constant dense<0.000000e+00> : vector<8x1x32xf32>
    %38 = tpu.matmul %37, %0, %cst_19 {dimension_numbers = #tpu.dot_dimension_numbers<[2], [1], [1], [2], [0, 0, 0, 1, 1, 2], [0], [0]>} : vector<8x1x8xf32>, vector<8x8x32xf32>, vector<8x1x32xf32> -> vector<8x1x32xf32>
    "tpu.trace_stop"() : () -> ()
    %39 = vector.shape_cast %38 : vector<8x1x32xf32> to vector<8x32xf32>
    %40 = tpu.concatenate %10, %39 in 1 : vector<8x32xf32>, vector<8x32xf32> -> vector<8x64xf32>
    %c0_20 = arith.constant 0 : index
    %c0_21 = arith.constant 0 : index
    %41 = vector.load %arg7[%c0_20, %c0_21] : memref<64x32xf32, #tpu.memory_space<vmem>>, vector<64x32xf32>
    %cst_22 = arith.constant dense<0.000000e+00> : vector<8x32xf32>
    %42 = tpu.matmul %40, %41, %cst_22 {dimension_numbers = #tpu.dot_dimension_numbers<[1], [0], [0], [1], [0, 0, 1, 1], [], []>} : vector<8x64xf32>, vector<64x32xf32>, vector<8x32xf32> -> vector<8x32xf32>
    %c0_23 = arith.constant 0 : index
    %c0_24 = arith.constant 0 : index
    %43 = vector.load %arg8[%c0_23, %c0_24] : memref<1x32xf32, #tpu.memory_space<vmem>>, vector<1x32xf32>
    %44 = vector.broadcast %43 : vector<1x32xf32> to vector<8x32xf32>
    %45 = arith.addf %42, %44 : vector<8x32xf32>
    %cst_25 = arith.constant 0.000000e+00 : f32
    %46 = vector.broadcast %cst_25 : f32 to vector<8x32xf32>
    %47 = arith.maximumf %45, %46 : vector<8x32xf32>
    %c0_26 = arith.constant 0 : index
    %c0_27 = arith.constant 0 : index
    %48 = vector.load %arg9[%c0_26, %c0_27] : memref<8x32xf32, #tpu.memory_space<vmem>>, vector<8x32xf32>
    tpu.vector_store %arg9[%c0_26, %c0_27], %47 {strides = array<i32>} : memref<8x32xf32, #tpu.memory_space<vmem>>, vector<8x32xf32>,
    return
  }
  func.func @transform_0(%arg0: i32) -> (i32, i32, i32) {
    %c0_i32 = arith.constant 0 : i32
    %c0_i32_0 = arith.constant 0 : i32
    %c0_i32_1 = arith.constant 0 : i32
    %c0_i32_2 = arith.constant 0 : i32
    return %c0_i32, %c0_i32_0, %c0_i32_1 : i32, i32, i32
  }
  func.func @transform_1(%arg0: i32) -> (i32, i32) {
    %c0_i32 = arith.constant 0 : i32
    %c0_i32_0 = arith.constant 0 : i32
    %c0_i32_1 = arith.constant 0 : i32
    return %c0_i32, %c0_i32_0 : i32, i32
  }
  func.func @transform_2(%arg0: i32) -> (i32, i32) {
    %c0_i32 = arith.constant 0 : i32
    %c0_i32_0 = arith.constant 0 : i32
    %c0_i32_1 = arith.constant 0 : i32
    return %c0_i32, %c0_i32_0 : i32, i32
  }
  func.func @transform_3(%arg0: i32) -> (i32, i32) {
    %c0_i32 = arith.constant 0 : i32
    %c0_i32_0 = arith.constant 0 : i32
    %c0_i32_1 = arith.constant 0 : i32
    return %c0_i32, %c0_i32_0 : i32, i32
  }
  func.func @transform_4(%arg0: i32) -> (i32, i32) {
    %c0_i32 = arith.constant 0 : i32
    %c0_i32_0 = arith.constant 0 : i32
    %c0_i32_1 = arith.constant 0 : i32
    return %c0_i32, %c0_i32_0 : i32, i32
  }
  func.func @transform_5(%arg0: i32) -> i32 {
    %c0_i32 = arith.constant 0 : i32
    %c0_i32_0 = arith.constant 0 : i32
    return %c0_i32 : i32
  }
  func.func @transform_6(%arg0: i32) -> (i32, i32) {
    %c0_i32 = arith.constant 0 : i32
    %c0_i32_0 = arith.constant 0 : i32
    %c0_i32_1 = arith.constant 0 : i32
    return %c0_i32, %c0_i32_0 : i32, i32
  }
  func.func @transform_7(%arg0: i32) -> (i32, i32) {
    %c0_i32 = arith.constant 0 : i32
    %c0_i32_0 = arith.constant 0 : i32
    %c0_i32_1 = arith.constant 0 : i32
    return %c0_i32, %c0_i32_0 : i32, i32
  }
  func.func @transform_8(%arg0: i32) -> (i32, i32) {
    %c0_i32 = arith.constant 0 : i32
    %c0_i32_0 = arith.constant 0 : i32
    %c0_i32_1 = arith.constant 0 : i32
    return %c0_i32, %c0_i32_0 : i32, i32
  }
}

</mosaic_0001>

<llo_original>
// kernel: tpu_custom_call.1
$region0: #{tpu_custom_call.1}
  #allocation0 [shape = 'u32[]', space=smem, size = 0x4, offset = 0x4, fixed_abs, tag = 'smem constant byte address 0x4 - core index']
  #allocation1 [shape = 'u32[72,128]{1,0:T(1,128)}', space=vmem, size = 0x9000, scoped, tag = 'internal scratch']
  #allocation2 [shape = 'f32[1]{0:T(128)S(6)}', space=smem, size = 0x200, scoped, tag = 'scoped memory for tpu_custom_call.1']
  %s0 = inlined_call_operand.vmem [shape: f32[8,8,32], index: 0, kind: input, shape index: {}]
  %s1 = inlined_call_operand.vmem [shape: f32[32,32], index: 1, kind: input, shape index: {}]
  %s2 = inlined_call_operand.vmem [shape: f32[1,32], index: 2, kind: input, shape index: {}]
  %s3 = inlined_call_operand.vmem [shape: f32[1,32], index: 3, kind: input, shape index: {}]
  %s4 = inlined_call_operand.vmem [shape: f32[1,32], index: 4, kind: input, shape index: {}]
  %s5 = inlined_call_operand.<no memory space> [shape: f32[1], index: 5, kind: input, shape index: {}]
  %s6 = inlined_call_operand.vmem [shape: f32[64,32], index: 6, kind: input, shape index: {}]
  %s7 = inlined_call_operand.vmem [shape: f32[1,32], index: 7, kind: input, shape index: {}]
  %s8 = inlined_call_operand.hbm [shape: f32[8,32], index: 8, kind: output, shape index: {}]
  %s9 = sld [smem:[#allocation0]]
  $region42: #{tpu_custom_call.1} parent=0
    _
  %s11 = ssub.s32 1, %s9
  %s12 = scalar_select 0, %s11, %s9
  %13 = sst [smem:[#allocation2]] %s5
  $region1: #{tpu_custom_call.1} parent=0
    #allocation3 [shape = 'u8[4096]{0}', space=vmem, size = 0x1000, scoped, tag = 'output window, operand 0, single buffered']
    #allocation4 [shape = 's32[1]{0}', space=sflag, size = 0x4, scoped, tag = 'scoped memory for tpu_custom_call.1']
    %14 = vsyncpa [#allocation4], 0
    // Predicated region
    $region2: #{tpu_custom_call.1} parent=1 // pred_check
      _
    $region3: #{tpu_custom_call.1} parent=1 // pred_check_branch
      %16 = sbr.rel (0) target = $region5
    $region4: #{tpu_custom_call.1} parent=1 // pred_region
      _
    $region5: #{tpu_custom_call.1} parent=1 // pred_fallthru
      _
    // Predicated region
    $region6: #{tpu_custom_call.1} parent=1 // pred_check
      _
    $region7: #{tpu_custom_call.1} parent=1 // pred_check_branch
      %18 = sbr.rel (0) target = $region9
    $region8: #{tpu_custom_call.1} parent=1 // pred_region
      _
    $region9: #{tpu_custom_call.1} parent=1 // pred_fallthru
      _
    // Predicated region
    $region10: #{tpu_custom_call.1} parent=1 // pred_check
      _
    $region11: #{tpu_custom_call.1} parent=1 // pred_check_branch
      %20 = sbr.rel (0) target = $region13
    $region12: #{tpu_custom_call.1} parent=1 // pred_region
      _
    $region13: #{tpu_custom_call.1} parent=1 // pred_fallthru
      _
    // Predicated region
    $region14: #{tpu_custom_call.1} parent=1 // pred_check
      _
    $region15: #{tpu_custom_call.1} parent=1 // pred_check_branch
      %22 = sbr.rel (0) target = $region17
    $region16: #{tpu_custom_call.1} parent=1 // pred_region
      _
    $region17: #{tpu_custom_call.1} parent=1 // pred_fallthru
      _
    // Predicated region
    $region18: #{tpu_custom_call.1} parent=1 // pred_check
      _
    $region19: #{tpu_custom_call.1} parent=1 // pred_check_branch
      %24 = sbr.rel (0) target = $region21
    $region20: #{tpu_custom_call.1} parent=1 // pred_region
      _
    $region21: #{tpu_custom_call.1} parent=1 // pred_fallthru
      _
    // Predicated region
    $region22: #{tpu_custom_call.1} parent=1 // pred_check
      _
    $region23: #{tpu_custom_call.1} parent=1 // pred_check_branch
      %26 = sbr.rel (0) target = $region25
    $region24: #{tpu_custom_call.1} parent=1 // pred_region
      _
    $region25: #{tpu_custom_call.1} parent=1 // pred_fallthru
      _
    // Predicated region
    $region26: #{tpu_custom_call.1} parent=1 // pred_check
      _
    $region27: #{tpu_custom_call.1} parent=1 // pred_check_branch
      %28 = sbr.rel (0) target = $region29
    $region28: #{tpu_custom_call.1} parent=1 // pred_region
      _
    $region29: #{tpu_custom_call.1} parent=1 // pred_fallthru
      _
    // Predicated region
    $region30: #{tpu_custom_call.1} parent=1 // pred_check
      _
    $region31: #{tpu_custom_call.1} parent=1 // pred_check_branch
      %30 = sbr.rel (0) target = $region33
    $region32: #{tpu_custom_call.1} parent=1 // pred_region
      _
    $region33: #{tpu_custom_call.1} parent=1 // pred_fallthru
      _
    %v31 = vld [vmem:[%s0] sm:$0xff]
    %v32 = vld [vmem:[%s0 + $0x8] sm:$0xff]
    %v33 = vld [vmem:[%s0 + $0x10] sm:$0xff]
    %v34 = vld [vmem:[%s0 + $0x18] sm:$0xff]
    %v35 = vld [vmem:[%s0 + $0x20] sm:$0xff]
    %v36 = vld [vmem:[%s0 + $0x28] sm:$0xff]
    %v37 = vld [vmem:[%s0 + $0x30] sm:$0xff]
    %v38 = vld [vmem:[%s0 + $0x38] sm:$0xff]
    %vm39 = vcmask 261120
    %v40 = vsel %vm39, %v31, 0.0
    %v41 = vrot.slane %v40, 4
    %v42 = vadd.f32 %v40, %v41
    %v43 = vrot.slane %v42, 2
    %v44 = vadd.f32 %v42, %v43
    %v45 = vrot.slane %v44, 1
    %v46 = vadd.f32 %v44, %v45
    %v47 = vsel %vm39, %v32, 0.0
    %v48 = vrot.slane %v47, 4
    %v49 = vadd.f32 %v47, %v48
    %v50 = vrot.slane %v49, 2
    %v51 = vadd.f32 %v49, %v50
    %v52 = vrot.slane %v51, 1
    %v53 = vadd.f32 %v51, %v52
    %v54 = vsel %vm39, %v33, 0.0
    %v55 = vrot.slane %v54, 4
    %v56 = vadd.f32 %v54, %v55
    %v57 = vrot.slane %v56, 2
    %v58 = vadd.f32 %v56, %v57
    %v59 = vrot.slane %v58, 1
    %v60 = vadd.f32 %v58, %v59
    %v61 = vsel %vm39, %v34, 0.0
    %v62 = vrot.slane %v61, 4
    %v63 = vadd.f32 %v61, %v62
    %v64 = vrot.slane %v63, 2
    %v65 = vadd.f32 %v63, %v64
    %v66 = vrot.slane %v65, 1
    %v67 = vadd.f32 %v65, %v66
    %v68 = vsel %vm39, %v35, 0.0
    %v69 = vrot.slane %v68, 4
    %v70 = vadd.f32 %v68, %v69
    %v71 = vrot.slane %v70, 2
    %v72 = vadd.f32 %v70, %v71
    %v73 = vrot.slane %v72, 1
    %v74 = vadd.f32 %v72, %v73
    %v75 = vsel %vm39, %v36, 0.0
    %v76 = vrot.slane %v75, 4
    %v77 = vadd.f32 %v75, %v76
    %v78 = vrot.slane %v77, 2
    %v79 = vadd.f32 %v77, %v78
    %v80 = vrot.slane %v79, 1
    %v81 = vadd.f32 %v79, %v80
    %v82 = vsel %vm39, %v37, 0.0
    %v83 = vrot.slane %v82, 4
    %v84 = vadd.f32 %v82, %v83
    %v85 = vrot.slane %v84, 2
    %v86 = vadd.f32 %v84, %v85
    %v87 = vrot.slane %v86, 1
    %v88 = vadd.f32 %v86, %v87
    %v89 = vsel %vm39, %v38, 0.0
    %v90 = vrot.slane %v89, 4
    %v91 = vadd.f32 %v89, %v90
    %v92 = vrot.slane %v91, 2
    %v93 = vadd.f32 %v91, %v92
    %v94 = vrot.slane %v93, 1
    %v95 = vadd.f32 %v93, %v94
    %v96 = vrcp.pop 8.0
    %v97 = vmul.f32 8.0, %v96
    %v98 = vsub.f32 1.0, %v97
    %v99 = vmul.f32 %v96, %v98
    %v100 = vadd.f32 %v96, %v99
    %vm101 = vweird.f32 %v96
    %v102 = vsel %vm101, %v96, %v100
    %v103 = vmul.f32 %v46, %v102
    %v104 = vmul.f32 %v53, %v102
    %v105 = vmul.f32 %v60, %v102
    %v106 = vmul.f32 %v67, %v102
    %v107 = vmul.f32 %v74, %v102
    %v108 = vmul.f32 %v81, %v102
    %v109 = vmul.f32 %v88, %v102
    %v110 = vmul.f32 %v95, %v102
    %v111 = vld [vmem:[%s1] sm:$0xff]
    %v112 = vld [vmem:[%s1 + $0x8] sm:$0xff]
    %v113 = vld [vmem:[%s1 + $0x10] sm:$0xff]
    %v114 = vld [vmem:[%s1 + $0x18] sm:$0xff]
    %v115 = vld [vmem:[%s2] sm:$0x1]
    %v117 = vperm.slane %v115, 0
    %vm127 = vcmask 1041409
    %v128 = vsel %vm127, %v104, %v103
    %vm129 = vcmask 1042434
    %v130 = vsel %vm129, %v105, %v128
    %vm131 = vcmask 1043459
    %v132 = vsel %vm131, %v106, %v130
    %vm133 = vcmask 1044484
    %v134 = vsel %vm133, %v107, %v132
    %vm135 = vcmask 1045509
    %v136 = vsel %vm135, %v108, %v134
    %vm137 = vcmask 1046534
    %v138 = vsel %vm137, %v109, %v136
    %vm139 = vcmask 1047559
    %v140 = vsel %vm139, %v110, %v138
    %v141 = vsel %vm39, %v140, 0
    %143 = vmatpush.msra.mxu0 0.0
    %144 = vmatpush.msra.mxu0 0.0
    %145 = vmatpush.msra.mxu0 0.0
    %146 = vmatpush.msra.mxu0 0.0
    %147 = vmatpush.msra.mxu0 0.0
    %148 = vmatpush.msra.mxu0 0.0
    %149 = vmatpush.msra.mxu0 0.0
    %150 = vmatpush.msra.mxu0 0.0
    %151 = vmatpush.msra.mxu0 0.0
    %152 = vmatpush.msra.mxu0 0.0
    %153 = vmatpush.msra.mxu0 0.0
    %154 = vmatpush.msra.mxu0 0.0
    %155 = vmatpush.msra.mxu0 %v114
    %156 = vmatpush.msra.mxu0 %v113
    %157 = vmatpush.msra.mxu0 %v112
    %158 = vmatpush.msra.mxu0 %v111
    %159 = vmatmul.f32.gmra.mxu0 %v141
    %v160 = vpop.f32.mrf.mxu0
    %v161 = vadd.f32 %v117, %v160
    %162 = vdwg.mxu0
    %v163 = vmax.f32 %v161, 0.0
    %v164 = vld [vmem:[%s3] sm:$0x1]
    %v166 = vperm.slane %v164, 0
    %v168 = vmul.f32 %v163, %v166
    %v169 = vsel %vm39, %v168, 0.0
    %170 = vadd.xlane.f32.xlu0 %v169
    %v171 = vpop.xlane.xlu0 %170
    %v172 = vld [vmem:[%s4] sm:$0x1]
    %v174 = vperm.slane %v172, 0
    %v176 = vmul.f32 %v31, %v174
    %v177 = vmul.f32 %v32, %v174
    %v178 = vmul.f32 %v33, %v174
    %v179 = vmul.f32 %v34, %v174
    %v180 = vmul.f32 %v35, %v174
    %v181 = vmul.f32 %v36, %v174
    %v182 = vmul.f32 %v37, %v174
    %v183 = vmul.f32 %v38, %v174
    %v184 = vsel %vm39, %v176, 0.0
    %185 = vadd.xlane.f32.xlu0 %v184
    %v186 = vpop.xlane.xlu0 %185
    %v187 = vsel %vm39, %v177, 0.0
    %188 = vadd.xlane.f32.xlu0 %v187
    %v189 = vpop.xlane.xlu0 %188
    %v190 = vsel %vm39, %v178, 0.0
    %191 = vadd.xlane.f32.xlu0 %v190
    %v192 = vpop.xlane.xlu0 %191
    %v193 = vsel %vm39, %v179, 0.0
    %194 = vadd.xlane.f32.xlu0 %v193
    %v195 = vpop.xlane.xlu0 %194
    %v196 = vsel %vm39, %v180, 0.0
    %197 = vadd.xlane.f32.xlu0 %v196
    %v198 = vpop.xlane.xlu0 %197
    %v199 = vsel %vm39, %v181, 0.0
    %200 = vadd.xlane.f32.xlu0 %v199
    %v201 = vpop.xlane.xlu0 %200
    %v202 = vsel %vm39, %v182, 0.0
    %203 = vadd.xlane.f32.xlu0 %v202
    %v204 = vpop.xlane.xlu0 %203
    %v205 = vsel %vm39, %v183, 0.0
    %206 = vadd.xlane.f32.xlu0 %v205
    %v207 = vpop.xlane.xlu0 %206
    %v209 = vperm.slane %v171, 0
    %v210 = vperm.slane %v171, 1
    %v211 = vperm.slane %v171, 2
    %v212 = vperm.slane %v171, 3
    %v213 = vperm.slane %v171, 4
    %v214 = vperm.slane %v171, 5
    %v215 = vperm.slane %v171, 6
    %v216 = vperm.slane %v171, 7
    %v225 = vadd.f32 %v186, %v209
    %v226 = vadd.f32 %v189, %v210
    %v227 = vadd.f32 %v192, %v211
    %v228 = vadd.f32 %v195, %v212
    %v229 = vadd.f32 %v198, %v213
    %v230 = vadd.f32 %v201, %v214
    %v231 = vadd.f32 %v204, %v215
    %v232 = vadd.f32 %v207, %v216
    %s233 = sld [smem:[#allocation2]]
    %v234 = vstv %s233
    %v235 = vadd.f32 %v225, %v234
    %v236 = vadd.f32 %v226, %v234
    %v237 = vadd.f32 %v227, %v234
    %v238 = vadd.f32 %v228, %v234
    %v239 = vadd.f32 %v229, %v234
    %v240 = vadd.f32 %v230, %v234
    %v241 = vadd.f32 %v231, %v234
    %v242 = vadd.f32 %v232, %v234
    %v243 = vmax.f32 %v235, 0.0
    %v244 = vmax.f32 %v236, 0.0
    %v245 = vmax.f32 %v237, 0.0
    %v246 = vmax.f32 %v238, 0.0
    %v247 = vmax.f32 %v239, 0.0
    %v248 = vmax.f32 %v240, 0.0
    %v249 = vmax.f32 %v241, 0.0
    %v250 = vmax.f32 %v242, 0.0
    %259 = vset.pattern.permute.xlu0 0
    %260 = vperm.xlu0 %259, %v243
    %v261 = vpop.permute.xlu0 %260
    %262 = vset.pattern.permute.xlu0 0
    %263 = vperm.xlu0 %262, %v244
    %v264 = vpop.permute.xlu0 %263
    %265 = vset.pattern.permute.xlu0 0
    %266 = vperm.xlu0 %265, %v245
    %v267 = vpop.permute.xlu0 %266
    %268 = vset.pattern.permute.xlu0 0
    %269 = vperm.xlu0 %268, %v246
    %v270 = vpop.permute.xlu0 %269
    %271 = vset.pattern.permute.xlu0 0
    %272 = vperm.xlu0 %271, %v247
    %v273 = vpop.permute.xlu0 %272
    %274 = vset.pattern.permute.xlu0 0
    %275 = vperm.xlu0 %274, %v248
    %v276 = vpop.permute.xlu0 %275
    %277 = vset.pattern.permute.xlu0 0
    %278 = vperm.xlu0 %277, %v249
    %v279 = vpop.permute.xlu0 %278
    %280 = vset.pattern.permute.xlu0 0
    %281 = vperm.xlu0 %280, %v250
    %v282 = vpop.permute.xlu0 %281
    %v283 = vlaneseq
    %v284 = vand.u32 %v283, 127
    %v285 = vperm.slane %v261, %v284
    %v286 = vperm.slane %v264, %v284
    %v287 = vperm.slane %v267, %v284
    %v288 = vperm.slane %v270, %v284
    %v289 = vperm.slane %v273, %v284
    %v290 = vperm.slane %v276, %v284
    %v291 = vperm.slane %v279, %v284
    %v292 = vperm.slane %v282, %v284
    %v293 = vsel %vm127, %v286, %v285
    %v294 = vsel %vm129, %v287, %v293
    %v295 = vsel %vm131, %v288, %v294
    %v296 = vsel %vm133, %v289, %v295
    %v297 = vsel %vm135, %v290, %v296
    %v298 = vsel %vm137, %v291, %v297
    %v299 = vsel %vm139, %v292, %v298
    %vm301 = vcmask 64512
    %v302 = vsel %vm301, %v299, -inf
    %303 = vmax.xlane.f32.xlu0 %v302
    %v304 = vpop.xlane.xlu0 %303
    %v306 = vperm.slane %v304, 0
    %v307 = vperm.slane %v304, 1
    %v308 = vperm.slane %v304, 2
    %v309 = vperm.slane %v304, 3
    %v310 = vperm.slane %v304, 4
    %v311 = vperm.slane %v304, 5
    %v312 = vperm.slane %v304, 6
    %v313 = vperm.slane %v304, 7
    %v322 = vsub.f32 %v243, %v306
    %v323 = vsub.f32 %v244, %v307
    %v324 = vsub.f32 %v245, %v308
    %v325 = vsub.f32 %v246, %v309
    %v326 = vsub.f32 %v247, %v310
    %v327 = vsub.f32 %v248, %v311
    %v328 = vsub.f32 %v249, %v312
    %v329 = vsub.f32 %v250, %v313
    %v330 = vmul.f32 %v322, 1.442695
    %v331 = vpow.pop %v330
    %v332 = vmul.f32 %v323, 1.442695
    %v333 = vpow.pop %v332
    %v334 = vmul.f32 %v324, 1.442695
    %v335 = vpow.pop %v334
    %v336 = vmul.f32 %v325, 1.442695
    %v337 = vpow.pop %v336
    %v338 = vmul.f32 %v326, 1.442695
    %v339 = vpow.pop %v338
    %v340 = vmul.f32 %v327, 1.442695
    %v341 = vpow.pop %v340
    %v342 = vmul.f32 %v328, 1.442695
    %v343 = vpow.pop %v342
    %v344 = vmul.f32 %v329, 1.442695
    %v345 = vpow.pop %v344
    %354 = vset.pattern.permute.xlu0 0
    %355 = vperm.xlu0 %354, %v331
    %v356 = vpop.permute.xlu0 %355
    %357 = vset.pattern.permute.xlu0 0
    %358 = vperm.xlu0 %357, %v333
    %v359 = vpop.permute.xlu0 %358
    %360 = vset.pattern.permute.xlu0 0
    %361 = vperm.xlu0 %360, %v335
    %v362 = vpop.permute.xlu0 %361
    %363 = vset.pattern.permute.xlu0 0
    %364 = vperm.xlu0 %363, %v337
    %v365 = vpop.permute.xlu0 %364
    %366 = vset.pattern.permute.xlu0 0
    %367 = vperm.xlu0 %366, %v339
    %v368 = vpop.permute.xlu0 %367
    %369 = vset.pattern.permute.xlu0 0
    %370 = vperm.xlu0 %369, %v341
    %v371 = vpop.permute.xlu0 %370
    %372 = vset.pattern.permute.xlu0 0
    %373 = vperm.xlu0 %372, %v343
    %v374 = vpop.permute.xlu0 %373
    %375 = vset.pattern.permute.xlu0 0
    %376 = vperm.xlu0 %375, %v345
    %v377 = vpop.permute.xlu0 %376
    %v378 = vperm.slane %v356, %v284
    %v379 = vperm.slane %v359, %v284
    %v380 = vperm.slane %v362, %v284
    %v381 = vperm.slane %v365, %v284
    %v382 = vperm.slane %v368, %v284
    %v383 = vperm.slane %v371, %v284
    %v384 = vperm.slane %v374, %v284
    %v385 = vperm.slane %v377, %v284
    %v386 = vsel %vm127, %v379, %v378
    %v387 = vsel %vm129, %v380, %v386
    %v388 = vsel %vm131, %v381, %v387
    %v389 = vsel %vm133, %v382, %v388
    %v390 = vsel %vm135, %v383, %v389
    %v391 = vsel %vm137, %v384, %v390
    %v392 = vsel %vm139, %v385, %v391
    %v394 = vsel %vm301, %v392, 0.0
    %395 = vadd.xlane.f32.xlu0 %v394
    %v396 = vpop.xlane.xlu0 %395
    %v398 = vperm.slane %v396, 0
    %v399 = vperm.slane %v396, 1
    %v400 = vperm.slane %v396, 2
    %v401 = vperm.slane %v396, 3
    %v402 = vperm.slane %v396, 4
    %v403 = vperm.slane %v396, 5
    %v404 = vperm.slane %v396, 6
    %v405 = vperm.slane %v396, 7
    %v414 = vrcp.pop %v398
    %v415 = vmul.f32 %v398, %v414
    %v416 = vsub.f32 1.0, %v415
    %v417 = vmul.f32 %v414, %v416
    %v418 = vadd.f32 %v414, %v417
    %vm419 = vweird.f32 %v398
    %vm420 = vweird.f32 %v414
    %vm421 = vmor %vm419, %vm420
    %v422 = vsel %vm421, %v414, %v418
    %v423 = vand.u32 2147483647, %v398
    %vm424 = vcmp.eq.f32.partialorder %v423, 8.507059e+37
    %v425 = vand.u32 %v398, 2147483648
    %v426 = vor.u32 1.1754944e-38, %v425
    %v427 = vsel %vm424, %v426, %v422
    %v428 = vmul.f32 %v331, %v427
    %v429 = vrcp.pop %v399
    %v430 = vmul.f32 %v399, %v429
    %v431 = vsub.f32 1.0, %v430
    %v432 = vmul.f32 %v429, %v431
    %v433 = vadd.f32 %v429, %v432
    %vm434 = vweird.f32 %v399
    %vm435 = vweird.f32 %v429
    %vm436 = vmor %vm434, %vm435
    %v437 = vsel %vm436, %v429, %v433
    %v438 = vand.u32 2147483647, %v399
    %vm439 = vcmp.eq.f32.partialorder %v438, 8.507059e+37
    %v440 = vand.u32 %v399, 2147483648
    %v441 = vor.u32 1.1754944e-38, %v440
    %v442 = vsel %vm439, %v441, %v437
    %v443 = vmul.f32 %v333, %v442
    %v444 = vrcp.pop %v400
    %v445 = vmul.f32 %v400, %v444
    %v446 = vsub.f32 1.0, %v445
    %v447 = vmul.f32 %v444, %v446
    %v448 = vadd.f32 %v444, %v447
    %vm449 = vweird.f32 %v400
    %vm450 = vweird.f32 %v444
    %vm451 = vmor %vm449, %vm450
    %v452 = vsel %vm451, %v444, %v448
    %v453 = vand.u32 2147483647, %v400
    %vm454 = vcmp.eq.f32.partialorder %v453, 8.507059e+37
    %v455 = vand.u32 %v400, 2147483648
    %v456 = vor.u32 1.1754944e-38, %v455
    %v457 = vsel %vm454, %v456, %v452
    %v458 = vmul.f32 %v335, %v457
    %v459 = vrcp.pop %v401
    %v460 = vmul.f32 %v401, %v459
    %v461 = vsub.f32 1.0, %v460
    %v462 = vmul.f32 %v459, %v461
    %v463 = vadd.f32 %v459, %v462
    %vm464 = vweird.f32 %v401
    %vm465 = vweird.f32 %v459
    %vm466 = vmor %vm464, %vm465
    %v467 = vsel %vm466, %v459, %v463
    %v468 = vand.u32 2147483647, %v401
    %vm469 = vcmp.eq.f32.partialorder %v468, 8.507059e+37
    %v470 = vand.u32 %v401, 2147483648
    %v471 = vor.u32 1.1754944e-38, %v470
    %v472 = vsel %vm469, %v471, %v467
    %v473 = vmul.f32 %v337, %v472
    %v474 = vrcp.pop %v402
    %v475 = vmul.f32 %v402, %v474
    %v476 = vsub.f32 1.0, %v475
    %v477 = vmul.f32 %v474, %v476
    %v478 = vadd.f32 %v474, %v477
    %vm479 = vweird.f32 %v402
    %vm480 = vweird.f32 %v474
    %vm481 = vmor %vm479, %vm480
    %v482 = vsel %vm481, %v474, %v478
    %v483 = vand.u32 2147483647, %v402
    %vm484 = vcmp.eq.f32.partialorder %v483, 8.507059e+37
    %v485 = vand.u32 %v402, 2147483648
    %v486 = vor.u32 1.1754944e-38, %v485
    %v487 = vsel %vm484, %v486, %v482
    %v488 = vmul.f32 %v339, %v487
    %v489 = vrcp.pop %v403
    %v490 = vmul.f32 %v403, %v489
    %v491 = vsub.f32 1.0, %v490
    %v492 = vmul.f32 %v489, %v491
    %v493 = vadd.f32 %v489, %v492
    %vm494 = vweird.f32 %v403
    %vm495 = vweird.f32 %v489
    %vm496 = vmor %vm494, %vm495
    %v497 = vsel %vm496, %v489, %v493
    %v498 = vand.u32 2147483647, %v403
    %vm499 = vcmp.eq.f32.partialorder %v498, 8.507059e+37
    %v500 = vand.u32 %v403, 2147483648
    %v501 = vor.u32 1.1754944e-38, %v500
    %v502 = vsel %vm499, %v501, %v497
    %v503 = vmul.f32 %v341, %v502
    %v504 = vrcp.pop %v404
    %v505 = vmul.f32 %v404, %v504
    %v506 = vsub.f32 1.0, %v505
    %v507 = vmul.f32 %v504, %v506
    %v508 = vadd.f32 %v504, %v507
    %vm509 = vweird.f32 %v404
    %vm510 = vweird.f32 %v504
    %vm511 = vmor %vm509, %vm510
    %v512 = vsel %vm511, %v504, %v508
    %v513 = vand.u32 2147483647, %v404
    %vm514 = vcmp.eq.f32.partialorder %v513, 8.507059e+37
    %v515 = vand.u32 %v404, 2147483648
    %v516 = vor.u32 1.1754944e-38, %v515
    %v517 = vsel %vm514, %v516, %v512
    %v518 = vmul.f32 %v343, %v517
    %v519 = vrcp.pop %v405
    %v520 = vmul.f32 %v405, %v519
    %v521 = vsub.f32 1.0, %v520
    %v522 = vmul.f32 %v519, %v521
    %v523 = vadd.f32 %v519, %v522
    %vm524 = vweird.f32 %v405
    %vm525 = vweird.f32 %v519
    %vm526 = vmor %vm524, %vm525
    %v527 = vsel %vm526, %v519, %v523
    %v528 = vand.u32 2147483647, %v405
    %vm529 = vcmp.eq.f32.partialorder %v528, 8.507059e+37
    %v530 = vand.u32 %v405, 2147483648
    %v531 = vor.u32 1.1754944e-38, %v530
    %v532 = vsel %vm529, %v531, %v527
    %v533 = vmul.f32 %v345, %v532
    %535 = vset.pattern.permute.xlu0 0
    %536 = vperm.xlu0 %535, %v428
    %v537 = vpop.permute.xlu0 %536
    %v538 = vperm.slane %v537, %v284
    %v539 = vsel %vm301, %v538, 0
    %541 = vmatpush.msra.mxu0 0.0
    %542 = vmatpush.msra.mxu0 0.0
    %543 = vmatpush.msra.mxu0 0.0
    %544 = vmatpush.msra.mxu0 0.0
    %545 = vmatpush.msra.mxu0 0.0
    %546 = vmatpush.msra.mxu0 0.0
    %547 = vmatpush.msra.mxu0 0.0
    %548 = vmatpush.msra.mxu0 0.0
    %549 = vmatpush.msra.mxu0 0.0
    %550 = vmatpush.msra.mxu0 0.0
    %551 = vmatpush.msra.mxu0 0.0
    %552 = vmatpush.msra.mxu0 0.0
    %553 = vmatpush.msra.mxu0 0.0
    %554 = vmatpush.msra.mxu0 0.0
    %555 = vmatpush.msra.mxu0 0.0
    %556 = vmatpush.msra.mxu0 %v31
    %557 = vmatmul.f32.gmra.mxu0 %v539
    %v558 = vpop.f32.mrf.mxu0
    %v559 = vadd.f32 0.0, %v558
    %560 = vdwg.mxu0
    %562 = vset.pattern.permute.xlu0 0
    %563 = vperm.xlu0 %562, %v443
    %v564 = vpop.permute.xlu0 %563
    %v565 = vperm.slane %v564, %v284
    %v566 = vsel %vm301, %v565, 0
    %568 = vmatpush.msra.mxu0 0.0
    %569 = vmatpush.msra.mxu0 0.0
    %570 = vmatpush.msra.mxu0 0.0
    %571 = vmatpush.msra.mxu0 0.0
    %572 = vmatpush.msra.mxu0 0.0
    %573 = vmatpush.msra.mxu0 0.0
    %574 = vmatpush.msra.mxu0 0.0
    %575 = vmatpush.msra.mxu0 0.0
    %576 = vmatpush.msra.mxu0 0.0
    %577 = vmatpush.msra.mxu0 0.0
    %578 = vmatpush.msra.mxu0 0.0
    %579 = vmatpush.msra.mxu0 0.0
    %580 = vmatpush.msra.mxu0 0.0
    %581 = vmatpush.msra.mxu0 0.0
    %582 = vmatpush.msra.mxu0 0.0
    %583 = vmatpush.msra.mxu0 %v32
    %584 = vmatmul.f32.gmra.mxu0 %v566
    %v585 = vpop.f32.mrf.mxu0
    %v586 = vadd.f32 0.0, %v585
    %587 = vdwg.mxu0
    %589 = vset.pattern.permute.xlu0 0
    %590 = vperm.xlu0 %589, %v458
    %v591 = vpop.permute.xlu0 %590
    %v592 = vperm.slane %v591, %v284
    %v593 = vsel %vm301, %v592, 0
    %595 = vmatpush.msra.mxu0 0.0
    %596 = vmatpush.msra.mxu0 0.0
    %597 = vmatpush.msra.mxu0 0.0
    %598 = vmatpush.msra.mxu0 0.0
    %599 = vmatpush.msra.mxu0 0.0
    %600 = vmatpush.msra.mxu0 0.0
    %601 = vmatpush.msra.mxu0 0.0
    %602 = vmatpush.msra.mxu0 0.0
    %603 = vmatpush.msra.mxu0 0.0
    %604 = vmatpush.msra.mxu0 0.0
    %605 = vmatpush.msra.mxu0 0.0
    %606 = vmatpush.msra.mxu0 0.0
    %607 = vmatpush.msra.mxu0 0.0
    %608 = vmatpush.msra.mxu0 0.0
    %609 = vmatpush.msra.mxu0 0.0
    %610 = vmatpush.msra.mxu0 %v33
    %611 = vmatmul.f32.gmra.mxu0 %v593
    %v612 = vpop.f32.mrf.mxu0
    %v613 = vadd.f32 0.0, %v612
    %614 = vdwg.mxu0
    %616 = vset.pattern.permute.xlu0 0
    %617 = vperm.xlu0 %616, %v473
    %v618 = vpop.permute.xlu0 %617
    %v619 = vperm.slane %v618, %v284
    %v620 = vsel %vm301, %v619, 0
    %622 = vmatpush.msra.mxu0 0.0
    %623 = vmatpush.msra.mxu0 0.0
    %624 = vmatpush.msra.mxu0 0.0
    %625 = vmatpush.msra.mxu0 0.0
    %626 = vmatpush.msra.mxu0 0.0
    %627 = vmatpush.msra.mxu0 0.0
    %628 = vmatpush.msra.mxu0 0.0
    %629 = vmatpush.msra.mxu0 0.0
    %630 = vmatpush.msra.mxu0 0.0
    %631 = vmatpush.msra.mxu0 0.0
    %632 = vmatpush.msra.mxu0 0.0
    %633 = vmatpush.msra.mxu0 0.0
    %634 = vmatpush.msra.mxu0 0.0
    %635 = vmatpush.msra.mxu0 0.0
    %636 = vmatpush.msra.mxu0 0.0
    %637 = vmatpush.msra.mxu0 %v34
    %638 = vmatmul.f32.gmra.mxu0 %v620
    %v639 = vpop.f32.mrf.mxu0
    %v640 = vadd.f32 0.0, %v639
    %641 = vdwg.mxu0
    %643 = vset.pattern.permute.xlu0 0
    %644 = vperm.xlu0 %643, %v488
    %v645 = vpop.permute.xlu0 %644
    %v646 = vperm.slane %v645, %v284
    %v647 = vsel %vm301, %v646, 0
    %649 = vmatpush.msra.mxu0 0.0
    %650 = vmatpush.msra.mxu0 0.0
    %651 = vmatpush.msra.mxu0 0.0
    %652 = vmatpush.msra.mxu0 0.0
    %653 = vmatpush.msra.mxu0 0.0
    %654 = vmatpush.msra.mxu0 0.0
    %655 = vmatpush.msra.mxu0 0.0
    %656 = vmatpush.msra.mxu0 0.0
    %657 = vmatpush.msra.mxu0 0.0
    %658 = vmatpush.msra.mxu0 0.0
    %659 = vmatpush.msra.mxu0 0.0
    %660 = vmatpush.msra.mxu0 0.0
    %661 = vmatpush.msra.mxu0 0.0
    %662 = vmatpush.msra.mxu0 0.0
    %663 = vmatpush.msra.mxu0 0.0
    %664 = vmatpush.msra.mxu0 %v35
    %665 = vmatmul.f32.gmra.mxu0 %v647
    %v666 = vpop.f32.mrf.mxu0
    %v667 = vadd.f32 0.0, %v666
    %668 = vdwg.mxu0
    %670 = vset.pattern.permute.xlu0 0
    %671 = vperm.xlu0 %670, %v503
    %v672 = vpop.permute.xlu0 %671
    %v673 = vperm.slane %v672, %v284
    %v674 = vsel %vm301, %v673, 0
    %676 = vmatpush.msra.mxu0 0.0
    %677 = vmatpush.msra.mxu0 0.0
    %678 = vmatpush.msra.mxu0 0.0
    %679 = vmatpush.msra.mxu0 0.0
    %680 = vmatpush.msra.mxu0 0.0
    %681 = vmatpush.msra.mxu0 0.0
    %682 = vmatpush.msra.mxu0 0.0
    %683 = vmatpush.msra.mxu0 0.0
    %684 = vmatpush.msra.mxu0 0.0
    %685 = vmatpush.msra.mxu0 0.0
    %686 = vmatpush.msra.mxu0 0.0
    %687 = vmatpush.msra.mxu0 0.0
    %688 = vmatpush.msra.mxu0 0.0
    %689 = vmatpush.msra.mxu0 0.0
    %690 = vmatpush.msra.mxu0 0.0
    %691 = vmatpush.msra.mxu0 %v36
    %692 = vmatmul.f32.gmra.mxu0 %v674
    %v693 = vpop.f32.mrf.mxu0
    %v694 = vadd.f32 0.0, %v693
    %695 = vdwg.mxu0
    %697 = vset.pattern.permute.xlu0 0
    %698 = vperm.xlu0 %697, %v518
    %v699 = vpop.permute.xlu0 %698
    %v700 = vperm.slane %v699, %v284
    %v701 = vsel %vm301, %v700, 0
    %703 = vmatpush.msra.mxu0 0.0
    %704 = vmatpush.msra.mxu0 0.0
    %705 = vmatpush.msra.mxu0 0.0
    %706 = vmatpush.msra.mxu0 0.0
    %707 = vmatpush.msra.mxu0 0.0
    %708 = vmatpush.msra.mxu0 0.0
    %709 = vmatpush.msra.mxu0 0.0
    %710 = vmatpush.msra.mxu0 0.0
    %711 = vmatpush.msra.mxu0 0.0
    %712 = vmatpush.msra.mxu0 0.0
    %713 = vmatpush.msra.mxu0 0.0
    %714 = vmatpush.msra.mxu0 0.0
    %715 = vmatpush.msra.mxu0 0.0
    %716 = vmatpush.msra.mxu0 0.0
    %717 = vmatpush.msra.mxu0 0.0
    %718 = vmatpush.msra.mxu0 %v37
    %719 = vmatmul.f32.gmra.mxu0 %v701
    %v720 = vpop.f32.mrf.mxu0
    %v721 = vadd.f32 0.0, %v720
    %722 = vdwg.mxu0
    %724 = vset.pattern.permute.xlu0 0
    %725 = vperm.xlu0 %724, %v533
    %v726 = vpop.permute.xlu0 %725
    %v727 = vperm.slane %v726, %v284
    %v728 = vsel %vm301, %v727, 0
    %730 = vmatpush.msra.mxu0 0.0
    %731 = vmatpush.msra.mxu0 0.0
    %732 = vmatpush.msra.mxu0 0.0
    %733 = vmatpush.msra.mxu0 0.0
    %734 = vmatpush.msra.mxu0 0.0
    %735 = vmatpush.msra.mxu0 0.0
    %736 = vmatpush.msra.mxu0 0.0
    %737 = vmatpush.msra.mxu0 0.0
    %738 = vmatpush.msra.mxu0 0.0
    %739 = vmatpush.msra.mxu0 0.0
    %740 = vmatpush.msra.mxu0 0.0
    %741 = vmatpush.msra.mxu0 0.0
    %742 = vmatpush.msra.mxu0 0.0
    %743 = vmatpush.msra.mxu0 0.0
    %744 = vmatpush.msra.mxu0 0.0
    %745 = vmatpush.msra.mxu0 %v38
    %746 = vmatmul.f32.gmra.mxu0 %v728
    %v747 = vpop.f32.mrf.mxu0
    %v748 = vadd.f32 0.0, %v747
    %749 = vdwg.mxu0
    %v758 = vrot.slane %v586, 7
    %v759 = vsel %vm127, %v758, %v559
    %v760 = vrot.slane %v613, 6
    %v761 = vsel %vm129, %v760, %v759
    %v762 = vrot.slane %v640, 5
    %v763 = vsel %vm131, %v762, %v761
    %v764 = vrot.slane %v667, 4
    %v765 = vsel %vm133, %v764, %v763
    %v766 = vrot.slane %v694, 3
    %v767 = vsel %vm135, %v766, %v765
    %v768 = vrot.slane %v721, 2
    %v769 = vsel %vm137, %v768, %v767
    %v770 = vrot.slane %v748, 1
    %v771 = vsel %vm139, %v770, %v769
    %772 = vrot.lane.b32.xlu0 %v771, 32
    %v773 = vpop.permute.xlu0 %772
    %v775 = vsel %vm39, %v163, %v773
    %v776 = vld [vmem:[%s6] sm:$0xff]
    %v777 = vld [vmem:[%s6 + $0x8] sm:$0xff]
    %v778 = vld [vmem:[%s6 + $0x10] sm:$0xff]
    %v779 = vld [vmem:[%s6 + $0x18] sm:$0xff]
    %v780 = vld [vmem:[%s6 + $0x20] sm:$0xff]
    %v781 = vld [vmem:[%s6 + $0x28] sm:$0xff]
    %v782 = vld [vmem:[%s6 + $0x30] sm:$0xff]
    %v783 = vld [vmem:[%s6 + $0x38] sm:$0xff]
    %v784 = vld [vmem:[%s7] sm:$0x1]
    %v786 = vperm.slane %v784, 0
    %vm788 = vcmask 523264
    %v790 = vsel %vm788, %v775, 0
    %792 = vmatpush.msra.mxu0 0.0
    %793 = vmatpush.msra.mxu0 0.0
    %794 = vmatpush.msra.mxu0 0.0
    %795 = vmatpush.msra.mxu0 0.0
    %796 = vmatpush.msra.mxu0 0.0
    %797 = vmatpush.msra.mxu0 0.0
    %798 = vmatpush.msra.mxu0 0.0
    %799 = vmatpush.msra.mxu0 0.0
    %800 = vmatpush.msra.mxu0 %v783
    %801 = vmatpush.msra.mxu0 %v782
    %802 = vmatpush.msra.mxu0 %v781
    %803 = vmatpush.msra.mxu0 %v780
    %804 = vmatpush.msra.mxu0 %v779
    %805 = vmatpush.msra.mxu0 %v778
    %806 = vmatpush.msra.mxu0 %v777
    %807 = vmatpush.msra.mxu0 %v776
    %808 = vmatmul.f32.gmra.mxu0 %v790
    %v809 = vpop.f32.mrf.mxu0
    %v810 = vadd.f32 %v786, %v809
    %811 = vdwg.mxu0
    %v812 = vmax.f32 %v810, 0.0
    %813 = vst.msk [vmem:[#allocation3] sm:$0xff] %vm39, %v812
    // Predicated region
    $region34: #{tpu_custom_call.1} parent=1 // pred_check
      _
    $region35: #{tpu_custom_call.1} parent=1 // pred_check_branch
      %815 = sbr.rel (0) target = $region37
    $region36: #{tpu_custom_call.1} parent=1 // pred_region
      %817 = vsyncadd [#allocation4], 0
      %s819 = sshll.u32 [#allocation3], 4
      %s820 = int_to_ptr.vmem [resolvable:$true] %s819
      %s821 = sshll.u32 %s8, 4
      %s822 = int_to_ptr.hbm [resolvable:$true] %s821
      %824 = dma.vmem_to_hbm [thread:$0]  %s820, 128, %s822, [#allocation4]
    $region37: #{tpu_custom_call.1} parent=1 // pred_fallthru
      _
    // Predicated region
    $region38: #{tpu_custom_call.1} parent=1 // pred_check
      _
    $region39: #{tpu_custom_call.1} parent=1 // pred_check_branch
      %826 = sbr.rel (0) target = $region41
    $region40: #{tpu_custom_call.1} parent=1 // pred_region
      %828 = dma.done [#allocation4], 128
    $region41: #{tpu_custom_call.1} parent=1 // pred_fallthru
      _
    %829 = vsyncpa [#allocation4], 1

</llo_original>
